<compile_context>
chip_gen: v6e
topology: v6e:2x2x1
jax: 0.10.0
libtpu: 0.0.40
codegen_flags: <defaults>
</compile_context>

<pallas_src>
import functools

import jax
import jax.numpy as jnp
from jax import lax
from jax.experimental import pallas as pl
from jax.experimental.pallas import tpu as pltpu


def _pair(v):
    return tuple(v) if isinstance(v, (tuple, list)) else (v, v)


def _quadruple(v):
    return tuple(v) if isinstance(v, (tuple, list)) else (v, v, v, v)


def _ce(p, i, j):
    """Compare-exchange: p[i] <- min, p[j] <- max (elementwise, VPU)."""
    a, b = p[i], p[j]
    p[i] = jnp.minimum(a, b)
    p[j] = jnp.maximum(a, b)


# Paeth / Devillard median-of-9 selection network: 19 compare-exchanges.
_MED9_NET = (
    (1, 2), (4, 5), (7, 8), (0, 1), (3, 4), (6, 7), (1, 2), (4, 5), (7, 8),
    (0, 3), (5, 8), (4, 7), (3, 6), (1, 4), (2, 5), (4, 7), (4, 2), (6, 4),
    (4, 2),
)


def _lower_median(vals):
    """Elementwise lower median (torch.median semantics) of a list of arrays."""
    kk = len(vals)
    if kk == 1:
        return vals[0]
    m = (kk - 1) // 2  # lower-median sorted index (matches torch.median)
    p = list(vals)
    if kk == 9:
        for i, j in _MED9_NET:
            _ce(p, i, j)
        return p[4]
    # General kernel sizes: partial bubble passes push the top (kk-1-m) maxima
    # above position m, then the median is the max of positions 0..m.
    # TODO(synk): replace with dedicated selection networks (e.g. ~99 CEs for
    # 5x5) and drop dead min/max halves explicitly instead of relying on DCE.
    for it in range(kk - 1 - m):
        for j in range(kk - 1 - it):
            _ce(p, j, j + 1)
    med = p[0]
    for j in range(1, m + 1):
        med = jnp.maximum(med, p[j])
    return med


def _median_pool_kernel(x_ref, o_ref, *, kh, kw, sh, sw, oh, ow, strip):
    # x_ref block: (tile_nc, Hp, Wp) -- W = lanes, H = sublanes, N*C = major.
    # o_ref block: (tile_nc, oh, ow).
    is3x3s1 = (kh == 3 and kw == 3 and sh == 1 and sw == 1)

    for r0 in range(0, oh, strip):
        rows = min(strip, oh - r0)

        if is3x3s1:
            # --- column-sort reuse path (3x3, stride 1) ---------------------
            # Sorted vertical triples per input column, shared by the three
            # horizontally overlapping windows of each output pixel.
            a = x_ref[:, pl.ds(r0 + 0, rows), :]
            b = x_ref[:, pl.ds(r0 + 1, rows), :]
            c = x_ref[:, pl.ds(r0 + 2, rows), :]
            b, c = jnp.minimum(b, c), jnp.maximum(b, c)
            a, b = jnp.minimum(a, b), jnp.maximum(a, b)
            b, c = jnp.minimum(b, c), jnp.maximum(b, c)
            lo, mid, hi = a, b, c  # (tile_nc, rows, Wp), each column sorted

            def col(v, d):
                return lax.slice_in_dim(v, d, d + ow, axis=2)

            max_lo = jnp.maximum(jnp.maximum(col(lo, 0), col(lo, 1)), col(lo, 2))
            min_hi = jnp.minimum(jnp.minimum(col(hi, 0), col(hi, 1)), col(hi, 2))
            m0, m1, m2 = col(mid, 0), col(mid, 1), col(mid, 2)
            med_mid = jnp.maximum(jnp.minimum(m0, m1),
                                  jnp.minimum(jnp.maximum(m0, m1), m2))
            # Exact identity: median of 9 = med3(max of column mins,
            #                                    med3 of column mids,
            #                                    min of column maxes).
            med = jnp.maximum(jnp.minimum(max_lo, med_mid),
                              jnp.minimum(jnp.maximum(max_lo, med_mid), min_hi))
        else:
            # --- generic kernel size / stride path --------------------------
            span_h = (rows - 1) * sh + 1
            span_w = (ow - 1) * sw + 1
            vals = []
            for di in range(kh):
                for dj in range(kw):
                    win = x_ref[:, pl.ds(r0 * sh + di, span_h), pl.ds(dj, span_w)]
                    if sh > 1 or sw > 1:
                        # TODO(synk): strided pl.ds reads straight from the ref
                        # would avoid materialising the full-span window first.
                        win = lax.slice(win, (0, 0, 0), win.shape, (1, sh, sw))
                    vals.append(win)
            med = _lower_median(vals)

        o_ref[:, pl.ds(r0, rows), :] = med.astype(o_ref.dtype)


def _vmem_capacity_bytes(default=64 * 1024 * 1024):
    """Generation-aware VMEM capacity (128 MiB v5e/v6e, 64 MiB v7x)."""
    try:
        cap = getattr(pltpu.get_tpu_info(), "vmem_capacity_bytes", None)
        if cap:
            return int(cap)
    except Exception:
        pass
    return default


def median_pool2d(x, kernel_size=3, stride=1, padding=0, same=False,
                  quantile=0.5, min_size=None):
    assert quantile == 0.5, "ensure median pooling"
    kh, kw = _pair(kernel_size)
    sh, sw = _pair(stride)
    pad = _quadruple(padding)  # (left, right, top, bottom), as in F.pad

    # Replicate MedianPool2d._padding
    if same:
        ih, iw = x.shape[2], x.shape[3]
        ph = max(kh - sh, 0) if ih % sh == 0 else max(kh - ih % sh, 0)
        pw = max(kw - sw, 0) if iw % sw == 0 else max(kw - iw % sw, 0)
        p_l = pw // 2
        p_r = pw - p_l
        p_t = ph // 2
        p_b = ph - p_t
        pad = (p_l, p_r, p_t, p_b)

    p_l, p_r, p_t, p_b = pad
    N, C, H, W = x.shape
    if any(p > 0 for p in pad):
        # torch reflect padding requires pad < corresponding input dim.
        assert p_l < W and p_r < W and p_t < H and p_b < H, (
            "reflect padding must be smaller than the spatial dims")
        # TODO(synk): build the reflected border in-kernel to save this one
        # extra HBM pass on very large inputs.
        x = jnp.pad(x, ((0, 0), (0, 0), (p_t, p_b), (p_l, p_r)), mode="reflect")

    N, C, Hp, Wp = x.shape
    oh = (Hp - kh) // sh + 1
    ow = (Wp - kw) // sw + 1
    assert oh >= 1 and ow >= 1, "kernel larger than (padded) input"
    kk = kh * kw
    NC = N * C
    is3x3s1 = (kh == 3 and kw == 3 and sh == 1 and sw == 1)

    # Zero-copy view: (N, C, Hp, Wp) -> (N*C, Hp, Wp). W is the lane axis,
    # so no relayout/transpose HBM passes are needed in either direction.
    xr = x.reshape(NC, Hp, Wp)

    itemsize = jnp.dtype(x.dtype).itemsize
    vmem_cap = _vmem_capacity_bytes()
    vmem_budget = vmem_cap // 3        # conservative working-set target
    vmem_limit = (vmem_cap * 3) // 4   # headroom over the estimate

    # Output-row strip so the kk live window temporaries stay strip-sized.
    tmp_arrays = 12 if is3x3s1 else (kk + 4)
    row_tmp_bytes = tmp_arrays * Wp * itemsize
    strip = int((vmem_budget // 6) // max(row_tmp_bytes, 1))
    strip = max(strip, -(-oh // 32))   # bound the unrolled strip count
    if strip >= oh:
        strip = oh
    else:
        strip = max(8, (strip // 8) * 8)  # sublane-aligned strip starts

    # N*C tile: double-buffered in/out blocks + strip temporaries per plane.
    per_nc_bytes = (2 * Hp * Wp + 2 * oh * ow
                    + tmp_arrays * (strip * max(sh, 1) + kh) * Wp) * itemsize
    max_tile_nc = max(1, int(vmem_budget // max(per_nc_bytes, 1)))
    if NC >= 2:
        # Keep >= 2 grid steps so both v7x TensorCores get work.
        max_tile_nc = min(max_tile_nc, (NC + 1) // 2)
    tile_nc = 1
    for d in range(1, min(NC, max_tile_nc) + 1):
        if NC % d == 0:
            tile_nc = d
    # TODO(synk): halo-tiled rows (pl.ANY + manual make_async_copy) for planes
    # so large that even a single-plane block exceeds the VMEM budget.

    kernel = functools.partial(
        _median_pool_kernel, kh=kh, kw=kw, sh=sh, sw=sw, oh=oh, ow=ow,
        strip=strip)

    out = pl.pallas_call(
        kernel,
        out_shape=jax.ShapeDtypeStruct((NC, oh, ow), x.dtype),
        grid=(NC // tile_nc,),
        in_specs=[pl.BlockSpec((tile_nc, Hp, Wp), lambda g: (g, 0, 0))],
        out_specs=pl.BlockSpec((tile_nc, oh, ow), lambda g: (g, 0, 0)),
        compiler_params=pltpu.CompilerParams(
            dimension_semantics=("parallel",),
            vmem_limit_bytes=int(vmem_limit),
        ),
    )(xr)

    out = out.reshape(N, C, oh, ow)  # zero-copy view back to NCHW

    # TODO(synk): min_size branch uses torch F.interpolate(mode='nearest');
    # unused with the default min_size=None, so not implemented here.
    if min_size is not None:
        raise NotImplementedError("min_size resizing not implemented")

    return out


def _median_pool2d_ref(x, kernel_size=3, stride=1, pad=(0, 0, 0, 0)):
    """Pure-JAX reference (lower median over unfolded windows)."""
    kh, kw = _pair(kernel_size)
    sh, sw = _pair(stride)
    p_l, p_r, p_t, p_b = pad
    if any(p > 0 for p in pad):
        x = jnp.pad(x, ((0, 0), (0, 0), (p_t, p_b), (p_l, p_r)), mode="reflect")
    N, C, H, W = x.shape
    oh = (H - kh) // sh + 1
    ow = (W - kw) // sw + 1
    wins = []
    for di in range(kh):
        for dj in range(kw):
            wins.append(
                x[:, :, di:di + (oh - 1) * sh + 1:sh, dj:dj + (ow - 1) * sw + 1:sw]
            )
    stacked = jnp.stack(wins, axis=-1)  # (N, C, oh, ow, kh*kw)
    srt = jnp.sort(stacked, axis=-1)
    return srt[..., (kh * kw - 1) // 2]


if __name__ == "__main__":
    key = jax.random.PRNGKey(0)
    x = jax.random.normal(key, (2, 4, 16, 16), dtype=jnp.float32)

    # Valid (no padding) 3x3 median filter.
    out = median_pool2d(x, kernel_size=3, stride=1, padding=0, same=False)
    out = jax.block_until_ready(out)
    ref = _median_pool2d_ref(x, kernel_size=3, stride=1)
    assert out.shape == (2, 4, 14, 14), out.shape
    assert jnp.allclose(out, ref, atol=1e-6), "mismatch vs reference (valid)"

    # 'same' padding path (exercises the reflect pad).
    out_same = median_pool2d(x, kernel_size=3, stride=1, same=True)
    out_same = jax.block_until_ready(out_same)
    ref_same = _median_pool2d_ref(x, kernel_size=3, stride=1, pad=(1, 1, 1, 1))
    assert out_same.shape == (2, 4, 16, 16), out_same.shape
    assert jnp.allclose(out_same, ref_same, atol=1e-6), "mismatch vs reference (same)"

    print("KERNEL_OK")
</pallas_src>

<mosaic_0001>
module attributes {stable_mosaic.version = 11 : i64} {
  func.func @_median_pool_kernel(%arg0: i32, %arg1: memref<4x16x16xf32, #tpu.memory_space<vmem>>, %arg2: memref<4x14x14xf32, #tpu.memory_space<vmem>>) attributes {dimension_semantics = [#tpu.dimension_semantics<parallel>], iteration_bounds = array<i64: 2>, scalar_prefetch = 0 : i64, scratch_operands = 0 : i64, tpu.core_type = #tpu.core_type<tc>, window_params = [{transform_indices = @transform_0, window_bounds = array<i64: 4, 16, 16>}, {transform_indices = @transform_1, window_bounds = array<i64: 4, 14, 14>}]} {
    %c0 = arith.constant 0 : index
    %c0_0 = arith.constant 0 : index
    %c0_1 = arith.constant 0 : index
    %0 = vector.load %arg1[%c0, %c0_0, %c0_1] : memref<4x16x16xf32, #tpu.memory_space<vmem>>, vector<4x14x16xf32>
    %c0_2 = arith.constant 0 : index
    %c1 = arith.constant 1 : index
    %c0_3 = arith.constant 0 : index
    %1 = vector.load %arg1[%c0_2, %c1, %c0_3] : memref<4x16x16xf32, #tpu.memory_space<vmem>>, vector<4x14x16xf32>
    %c0_4 = arith.constant 0 : index
    %c2 = arith.constant 2 : index
    %c0_5 = arith.constant 0 : index
    %2 = vector.load %arg1[%c0_4, %c2, %c0_5] : memref<4x16x16xf32, #tpu.memory_space<vmem>>, vector<4x14x16xf32>
    %3 = arith.minimumf %1, %2 : vector<4x14x16xf32>
    %4 = arith.maximumf %1, %2 : vector<4x14x16xf32>
    %5 = arith.minimumf %0, %3 : vector<4x14x16xf32>
    %6 = arith.maximumf %0, %3 : vector<4x14x16xf32>
    %7 = arith.minimumf %6, %4 : vector<4x14x16xf32>
    %8 = arith.maximumf %6, %4 : vector<4x14x16xf32>
    %9 = vector.extract_strided_slice %5 {offsets = [0, 0, 0], sizes = [4, 14, 14], strides = [1, 1, 1]} : vector<4x14x16xf32> to vector<4x14x14xf32>
    %10 = vector.extract_strided_slice %5 {offsets = [0, 0, 1], sizes = [4, 14, 14], strides = [1, 1, 1]} : vector<4x14x16xf32> to vector<4x14x14xf32>
    %11 = arith.maximumf %9, %10 : vector<4x14x14xf32>
    %12 = vector.extract_strided_slice %5 {offsets = [0, 0, 2], sizes = [4, 14, 14], strides = [1, 1, 1]} : vector<4x14x16xf32> to vector<4x14x14xf32>
    %13 = arith.maximumf %11, %12 : vector<4x14x14xf32>
    %14 = vector.extract_strided_slice %8 {offsets = [0, 0, 0], sizes = [4, 14, 14], strides = [1, 1, 1]} : vector<4x14x16xf32> to vector<4x14x14xf32>
    %15 = vector.extract_strided_slice %8 {offsets = [0, 0, 1], sizes = [4, 14, 14], strides = [1, 1, 1]} : vector<4x14x16xf32> to vector<4x14x14xf32>
    %16 = arith.minimumf %14, %15 : vector<4x14x14xf32>
    %17 = vector.extract_strided_slice %8 {offsets = [0, 0, 2], sizes = [4, 14, 14], strides = [1, 1, 1]} : vector<4x14x16xf32> to vector<4x14x14xf32>
    %18 = arith.minimumf %16, %17 : vector<4x14x14xf32>
    %19 = vector.extract_strided_slice %7 {offsets = [0, 0, 0], sizes = [4, 14, 14], strides = [1, 1, 1]} : vector<4x14x16xf32> to vector<4x14x14xf32>
    %20 = vector.extract_strided_slice %7 {offsets = [0, 0, 1], sizes = [4, 14, 14], strides = [1, 1, 1]} : vector<4x14x16xf32> to vector<4x14x14xf32>
    %21 = vector.extract_strided_slice %7 {offsets = [0, 0, 2], sizes = [4, 14, 14], strides = [1, 1, 1]} : vector<4x14x16xf32> to vector<4x14x14xf32>
    %22 = arith.minimumf %19, %20 : vector<4x14x14xf32>
    %23 = arith.maximumf %19, %20 : vector<4x14x14xf32>
    %24 = arith.minimumf %23, %21 : vector<4x14x14xf32>
    %25 = arith.maximumf %22, %24 : vector<4x14x14xf32>
    %26 = arith.minimumf %13, %25 : vector<4x14x14xf32>
    %27 = arith.maximumf %13, %25 : vector<4x14x14xf32>
    %28 = arith.minimumf %27, %18 : vector<4x14x14xf32>
    %29 = arith.maximumf %26, %28 : vector<4x14x14xf32>
    %c0_6 = arith.constant 0 : index
    %c0_7 = arith.constant 0 : index
    %c0_8 = arith.constant 0 : index
    %30 = vector.load %arg2[%c0_6, %c0_7, %c0_8] : memref<4x14x14xf32, #tpu.memory_space<vmem>>, vector<4x14x14xf32>
    tpu.vector_store %arg2[%c0_6, %c0_7, %c0_8], %29 {strides = array<i32>} : memref<4x14x14xf32, #tpu.memory_space<vmem>>, vector<4x14x14xf32>,
    return
  }
  func.func @transform_0(%arg0: i32) -> (i32, i32, i32) {
    %c0_i32 = arith.constant 0 : i32
    %c0_i32_0 = arith.constant 0 : i32
    %c0_i32_1 = arith.constant 0 : i32
    return %arg0, %c0_i32, %c0_i32_0 : i32, i32, i32
  }
  func.func @transform_1(%arg0: i32) -> (i32, i32, i32) {
    %c0_i32 = arith.constant 0 : i32
    %c0_i32_0 = arith.constant 0 : i32
    %c0_i32_1 = arith.constant 0 : i32
    return %arg0, %c0_i32, %c0_i32_0 : i32, i32, i32
  }
}

</mosaic_0001>

<llo_original>
// kernel: tpu_custom_call.1
$region0: #{tpu_custom_call.1}
  #allocation0 [shape = 'u32[]', space=smem, size = 0x4, offset = 0x4, fixed_abs, tag = 'smem constant byte address 0x4 - core index']
  #allocation1 [shape = 'u32[144,128]{1,0:T(1,128)}', space=vmem, size = 0x12000, scoped, tag = 'internal scratch']
  %s0 = inlined_call_operand.hbm [shape: f32[8,16,16], index: 0, kind: input, shape index: {}]
  %s1 = inlined_call_operand.vmem [shape: f32[8,14,14], index: 1, kind: output, shape index: {}]
  %s2 = sld [smem:[#allocation0]]
  $region41: #{tpu_custom_call.1} parent=0
    _
  %s4 = ssub.s32 1, %s2
  %s5 = scalar_select 0, %s4, %s2
  $region1: #{tpu_custom_call.1} parent=0
    #allocation2 [shape = 'u8[65536]{0}', space=vmem, size = 0x10000, scoped, tag = 'input window, operand 0']
    #allocation3 [shape = 's32[2]{0}', space=sflag, size = 0x8, scoped, tag = 'scoped memory for tpu_custom_call.1']
    %6 = vsyncpa [#allocation3], 0
    %s7 = scalar_lea.sflag [#allocation3], 1
    %8 = vsyncpa %s7, 0
    loop: start=0, step=1, limit=4
    $region2: #{tpu_custom_call.1} parent=1 // loop_pre_header
      _
    $region3: #{tpu_custom_call.1} parent=1 // loop_header
      %s10 = sphi 0, %s14
      %p11 = scmp.ge.s32.totalorder %s10, 4
      %s20 = sphi 0, %s22
      %s23 = sphi 0, %s20
      %s24 = sphi 0, %s23
      %s40 = sphi 0, %s24
      %s46 = sphi 0, %s48
      %s49 = sphi 0, %s46
      %s50 = sphi 0, %s49
      %s66 = sphi 0, %s50
    $region4: #{tpu_custom_call.1} parent=1 // loop_header_branch
      %13 = sbr.rel (%p11) target = $region8
    $region5: #{tpu_custom_call.1} parent=1 // loop_body
      %s15 = ssub.s32 %s10, 1
      %s16 = ssub.s32 %s10, 2
      %s17 = sadd.s32 %s10, 1
      %s18 = ssub.s32 %s10, %s17
      %p19 = scmp.eq.s32.totalorder %s18, 0
      %s21 = sadd.s32 %s20, 1
      %s22 = scalar_select %p19, %s20, %s21
      %p25 = pneg %p19
      %p26 = scmp.eq.s32.totalorder %s10, 1
      %p27 = por %p25, %p26
      %p28 = scmp.ne.s32.totalorder %s20, %s23
      %p29 = scmp.eq.s32.totalorder %s10, 0
      %p30 = por %p28, %p29
      %p31 = scmp.ne.s32.totalorder %s20, %s23
      %p32 = scmp.eq.s32.totalorder %s15, 1
      %p33 = por %p31, %p32
      %p34 = scmp.ne.s32.totalorder %s23, %s24
      %p35 = scmp.eq.s32.totalorder %s15, 0
      %p36 = por %p34, %p35
      %p37 = scmp.ne.s32.totalorder %s23, %s24
      %p38 = scmp.eq.s32.totalorder %s16, 1
      %p39 = por %p37, %p38
      %p41 = scmp.ne.s32.totalorder %s24, %s40
      %p42 = scmp.eq.s32.totalorder %s16, 0
      %p43 = por %p41, %p42
      %s44 = ssub.s32 %s10, %s17
      %p45 = scmp.eq.s32.totalorder %s44, 0
      %s47 = sadd.s32 %s46, 1
      %s48 = scalar_select %p45, %s46, %s47
      %p51 = pneg %p45
      %p52 = scmp.eq.s32.totalorder %s10, 1
      %p53 = por %p51, %p52
      %p54 = scmp.ne.s32.totalorder %s46, %s49
      %p55 = scmp.eq.s32.totalorder %s10, 0
      %p56 = por %p54, %p55
      %p57 = scmp.ne.s32.totalorder %s46, %s49
      %p58 = scmp.eq.s32.totalorder %s15, 1
      %p59 = por %p57, %p58
      %p60 = scmp.ne.s32.totalorder %s49, %s50
      %p61 = scmp.eq.s32.totalorder %s15, 0
      %p62 = por %p60, %p61
      %p63 = scmp.ne.s32.totalorder %s49, %s50
      %p64 = scmp.eq.s32.totalorder %s16, 1
      %p65 = por %p63, %p64
      %p67 = scmp.ne.s32.totalorder %s50, %s66
      %p68 = scmp.eq.s32.totalorder %s16, 0
      %p69 = por %p67, %p68
      %p70 = scmp.le.s32.totalorder 1, %s10
      %p71 = scmp.lt.s32.totalorder %s10, 3
      %p72 = pnand %p70, %p71
      %p73 = pneg %p72
      // Predicated region
      $region9: #{tpu_custom_call.1} parent=5 // pred_check
        _
      $region10: #{tpu_custom_call.1} parent=5 // pred_check_branch
        %75 = sbr.rel (%p72) target = $region12
      $region11: #{tpu_custom_call.1} parent=5 // pred_region
        %s76 = ssub.s32 %s10, 1
      $region12: #{tpu_custom_call.1} parent=5 // pred_fallthru
        _
      %p77 = scmp.lt.s32.totalorder %s10, 2
      // Predicated region
      $region13: #{tpu_custom_call.1} parent=5 // pred_check
        %p78 = pneg %p77
      $region14: #{tpu_custom_call.1} parent=5 // pred_check_branch
        %80 = sbr.rel (%p78) target = $region16
      $region15: #{tpu_custom_call.1} parent=5 // pred_region
        // Predicated region
        $region17: #{tpu_custom_call.1} parent=15 // pred_check
          %p81 = pneg %p30
        $region18: #{tpu_custom_call.1} parent=15 // pred_check_branch
          %83 = sbr.rel (%p81) target = $region20
        $region19: #{tpu_custom_call.1} parent=15 // pred_region
          %s84 = sand.u32 %s20, 1
          %s85 = scalar_lea.sflag [#allocation3], %s84
          %s86 = sand.u32 %s20, 1
          %s87 = smul.addr %s86, 64
          %s88 = scalar_lea.vmem [#allocation2], %s87
          %s89 = smul.u32 4, %s10
          %s91 = ssub.s32 1024, 1024
          %92 = vsyncadd %s85, %s91
          %s93 = smul.addr %s89, 2
          %s94 = smul.addr %s93, 128
          %s95 = scalar_lea.hbm %s0, %s94
          %s96 = sshll.u32 %s88, 4
          %s97 = int_to_ptr.vmem [resolvable:$true] %s96
          %102 = dma.hbm_to_vmem [thread:$0]  %s95, 1024, %s97, %s85, 128, 128, 8
        $region20: #{tpu_custom_call.1} parent=15 // pred_fallthru
          _
      $region16: #{tpu_custom_call.1} parent=5 // pred_fallthru
        _
      %p103 = scmp.le.s32.totalorder 1, %s10
      %p104 = scmp.lt.s32.totalorder %s10, 3
      %p105 = pnand %p103, %p104
      %p106 = pneg %p105
      // Predicated region
      $region21: #{tpu_custom_call.1} parent=5 // pred_check
        _
      $region22: #{tpu_custom_call.1} parent=5 // pred_check_branch
        %108 = sbr.rel (%p105) target = $region24
      $region23: #{tpu_custom_call.1} parent=5 // pred_region
        %s109 = ssub.s32 %s10, 1
        %s110 = sand.u32 %s23, 1
        %s111 = scalar_lea.sflag [#allocation3], %s110
        %s112 = sand.u32 %s23, 1
        %s113 = smul.addr %s112, 64
        %s114 = scalar_lea.vmem [#allocation2], %s113
        // Predicated region
        $region25: #{tpu_custom_call.1} parent=23 // pred_check
          %p115 = pneg %p36
        $region26: #{tpu_custom_call.1} parent=23 // pred_check_branch
          %117 = sbr.rel (%p115) target = $region28
        $region27: #{tpu_custom_call.1} parent=23 // pred_region
          %118 = dma.done %s111, 1024
        $region28: #{tpu_custom_call.1} parent=23 // pred_fallthru
          _
        %s119 = sand.u32 %s23, 1
        %s120 = scalar_lea.sflag [#allocation3], %s119
        %s121 = sand.u32 %s23, 1
        %s122 = smul.addr %s121, 64
        %s123 = scalar_lea.vmem [#allocation2], %s122
        %p124 = pneg %p36
        %p125 = pneg %p33
        %p126 = pneg %p62
        %p127 = pneg %p59
        %s128 = smul.u32 4, %s15
        %p129 = scmp.lt.s32.totalorder %s128, 7
        %s130 = scalar_select %p129, %s128, 7
        %s131 = smul.addr %s130, 2
        %s132 = smul.addr %s131, 8
        %s133 = scalar_lea.vmem %s1, %s132
        %s134 = smul.u32 4, %s15
        %s135 = smul.u32 4, %s15
        %p136 = scmp.lt.s32.totalorder %s135, 7
        %s137 = scalar_select %p136, %s135, 7
        %s138 = smul.addr %s137, 2
        %s139 = smul.addr %s138, 8
        %s140 = scalar_lea.vmem %s1, %s139
        %s141 = smul.u32 4, %s15
        %v142 = vld [vmem:[%s114] sm:$0xff]
        %v143 = vld [vmem:[%s114 + $0x8] sm:$0x3f]
        %v144 = vld [vmem:[%s114 + $0x10] sm:$0xff]
        %v145 = vld [vmem:[%s114 + $0x18] sm:$0x3f]
        %v146 = vld [vmem:[%s114 + $0x20] sm:$0xff]
        %v147 = vld [vmem:[%s114 + $0x28] sm:$0x3f]
        %v148 = vld [vmem:[%s114 + $0x30] sm:$0xff]
        %v149 = vld [vmem:[%s114 + $0x38] sm:$0x3f]
        %v150 = vld [vmem:[%s114 + $0x1] sm:$0xff]
        %v151 = vld [vmem:[%s114 + $0x9] sm:$0x3f]
        %v152 = vld [vmem:[%s114 + $0x11] sm:$0xff]
        %v153 = vld [vmem:[%s114 + $0x19] sm:$0x3f]
        %v154 = vld [vmem:[%s114 + $0x21] sm:$0xff]
        %v155 = vld [vmem:[%s114 + $0x29] sm:$0x3f]
        %v156 = vld [vmem:[%s114 + $0x31] sm:$0xff]
        %v157 = vld [vmem:[%s114 + $0x39] sm:$0x3f]
        %v158 = vld [vmem:[%s114 + $0x2] sm:$0xff]
        %v159 = vld [vmem:[%s114 + $0xa] sm:$0x3f]
        %v160 = vld [vmem:[%s114 + $0x12] sm:$0xff]
        %v161 = vld [vmem:[%s114 + $0x1a] sm:$0x3f]
        %v162 = vld [vmem:[%s114 + $0x22] sm:$0xff]
        %v163 = vld [vmem:[%s114 + $0x2a] sm:$0x3f]
        %v164 = vld [vmem:[%s114 + $0x32] sm:$0xff]
        %v165 = vld [vmem:[%s114 + $0x3a] sm:$0x3f]
        %v166 = vmin.f32 %v150, %v158
        %v167 = vmin.f32 %v151, %v159
        %v168 = vmin.f32 %v152, %v160
        %v169 = vmin.f32 %v153, %v161
        %v170 = vmin.f32 %v154, %v162
        %v171 = vmin.f32 %v155, %v163
        %v172 = vmin.f32 %v156, %v164
        %v173 = vmin.f32 %v157, %v165
        %v174 = vmax.f32 %v150, %v158
        %v175 = vmax.f32 %v151, %v159
        %v176 = vmax.f32 %v152, %v160
        %v177 = vmax.f32 %v153, %v161
        %v178 = vmax.f32 %v154, %v162
        %v179 = vmax.f32 %v155, %v163
        %v180 = vmax.f32 %v156, %v164
        %v181 = vmax.f32 %v157, %v165
        %v182 = vmin.f32 %v142, %v166
        %v183 = vmin.f32 %v143, %v167
        %v184 = vmin.f32 %v144, %v168
        %v185 = vmin.f32 %v145, %v169
        %v186 = vmin.f32 %v146, %v170
        %v187 = vmin.f32 %v147, %v171
        %v188 = vmin.f32 %v148, %v172
        %v189 = vmin.f32 %v149, %v173
        %v190 = vmax.f32 %v142, %v166
        %v191 = vmax.f32 %v143, %v167
        %v192 = vmax.f32 %v144, %v168
        %v193 = vmax.f32 %v145, %v169
        %v194 = vmax.f32 %v146, %v170
        %v195 = vmax.f32 %v147, %v171
        %v196 = vmax.f32 %v148, %v172
        %v197 = vmax.f32 %v149, %v173
        %v198 = vmin.f32 %v190, %v174
        %v199 = vmin.f32 %v191, %v175
        %v200 = vmin.f32 %v192, %v176
        %v201 = vmin.f32 %v193, %v177
        %v202 = vmin.f32 %v194, %v178
        %v203 = vmin.f32 %v195, %v179
        %v204 = vmin.f32 %v196, %v180
        %v205 = vmin.f32 %v197, %v181
        %v206 = vmax.f32 %v190, %v174
        %v207 = vmax.f32 %v191, %v175
        %v208 = vmax.f32 %v192, %v176
        %v209 = vmax.f32 %v193, %v177
        %v210 = vmax.f32 %v194, %v178
        %v211 = vmax.f32 %v195, %v179
        %v212 = vmax.f32 %v196, %v180
        %v213 = vmax.f32 %v197, %v181
        %222 = vrot.lane.b32.xlu0 %v182, 127
        %v223 = vpop.permute.xlu0 %222
        %224 = vrot.lane.b32.xlu0 %v183, 127
        %v225 = vpop.permute.xlu0 %224
        %226 = vrot.lane.b32.xlu0 %v184, 127
        %v227 = vpop.permute.xlu0 %226
        %228 = vrot.lane.b32.xlu0 %v185, 127
        %v229 = vpop.permute.xlu0 %228
        %230 = vrot.lane.b32.xlu0 %v186, 127
        %v231 = vpop.permute.xlu0 %230
        %232 = vrot.lane.b32.xlu0 %v187, 127
        %v233 = vpop.permute.xlu0 %232
        %234 = vrot.lane.b32.xlu0 %v188, 127
        %v235 = vpop.permute.xlu0 %234
        %236 = vrot.lane.b32.xlu0 %v189, 127
        %v237 = vpop.permute.xlu0 %236
        %v246 = vmax.f32 %v182, %v223
        %v247 = vmax.f32 %v183, %v225
        %v248 = vmax.f32 %v184, %v227
        %v249 = vmax.f32 %v185, %v229
        %v250 = vmax.f32 %v186, %v231
        %v251 = vmax.f32 %v187, %v233
        %v252 = vmax.f32 %v188, %v235
        %v253 = vmax.f32 %v189, %v237
        %254 = vrot.lane.b32.xlu0 %v182, 126
        %v255 = vpop.permute.xlu0 %254
        %256 = vrot.lane.b32.xlu0 %v183, 126
        %v257 = vpop.permute.xlu0 %256
        %258 = vrot.lane.b32.xlu0 %v184, 126
        %v259 = vpop.permute.xlu0 %258
        %260 = vrot.lane.b32.xlu0 %v185, 126
        %v261 = vpop.permute.xlu0 %260
        %262 = vrot.lane.b32.xlu0 %v186, 126
        %v263 = vpop.permute.xlu0 %262
        %264 = vrot.lane.b32.xlu0 %v187, 126
        %v265 = vpop.permute.xlu0 %264
        %266 = vrot.lane.b32.xlu0 %v188, 126
        %v267 = vpop.permute.xlu0 %266
        %268 = vrot.lane.b32.xlu0 %v189, 126
        %v269 = vpop.permute.xlu0 %268
        %v278 = vmax.f32 %v246, %v255
        %v279 = vmax.f32 %v247, %v257
        %v280 = vmax.f32 %v248, %v259
        %v281 = vmax.f32 %v249, %v261
        %v282 = vmax.f32 %v250, %v263
        %v283 = vmax.f32 %v251, %v265
        %v284 = vmax.f32 %v252, %v267
        %v285 = vmax.f32 %v253, %v269
        %294 = vrot.lane.b32.xlu0 %v206, 127
        %v295 = vpop.permute.xlu0 %294
        %296 = vrot.lane.b32.xlu0 %v207, 127
        %v297 = vpop.permute.xlu0 %296
        %298 = vrot.lane.b32.xlu0 %v208, 127
        %v299 = vpop.permute.xlu0 %298
        %300 = vrot.lane.b32.xlu0 %v209, 127
        %v301 = vpop.permute.xlu0 %300
        %302 = vrot.lane.b32.xlu0 %v210, 127
        %v303 = vpop.permute.xlu0 %302
        %304 = vrot.lane.b32.xlu0 %v211, 127
        %v305 = vpop.permute.xlu0 %304
        %306 = vrot.lane.b32.xlu0 %v212, 127
        %v307 = vpop.permute.xlu0 %306
        %308 = vrot.lane.b32.xlu0 %v213, 127
        %v309 = vpop.permute.xlu0 %308
        %v318 = vmin.f32 %v206, %v295
        %v319 = vmin.f32 %v207, %v297
        %v320 = vmin.f32 %v208, %v299
        %v321 = vmin.f32 %v209, %v301
        %v322 = vmin.f32 %v210, %v303
        %v323 = vmin.f32 %v211, %v305
        %v324 = vmin.f32 %v212, %v307
        %v325 = vmin.f32 %v213, %v309
        %326 = vrot.lane.b32.xlu0 %v206, 126
        %v327 = vpop.permute.xlu0 %326
        %328 = vrot.lane.b32.xlu0 %v207, 126
        %v329 = vpop.permute.xlu0 %328
        %330 = vrot.lane.b32.xlu0 %v208, 126
        %v331 = vpop.permute.xlu0 %330
        %332 = vrot.lane.b32.xlu0 %v209, 126
        %v333 = vpop.permute.xlu0 %332
        %334 = vrot.lane.b32.xlu0 %v210, 126
        %v335 = vpop.permute.xlu0 %334
        %336 = vrot.lane.b32.xlu0 %v211, 126
        %v337 = vpop.permute.xlu0 %336
        %338 = vrot.lane.b32.xlu0 %v212, 126
        %v339 = vpop.permute.xlu0 %338
        %340 = vrot.lane.b32.xlu0 %v213, 126
        %v341 = vpop.permute.xlu0 %340
        %v350 = vmin.f32 %v318, %v327
        %v351 = vmin.f32 %v319, %v329
        %v352 = vmin.f32 %v320, %v331
        %v353 = vmin.f32 %v321, %v333
        %v354 = vmin.f32 %v322, %v335
        %v355 = vmin.f32 %v323, %v337
        %v356 = vmin.f32 %v324, %v339
        %v357 = vmin.f32 %v325, %v341
        %366 = vrot.lane.b32.xlu0 %v198, 127
        %v367 = vpop.permute.xlu0 %366
        %368 = vrot.lane.b32.xlu0 %v199, 127
        %v369 = vpop.permute.xlu0 %368
        %370 = vrot.lane.b32.xlu0 %v200, 127
        %v371 = vpop.permute.xlu0 %370
        %372 = vrot.lane.b32.xlu0 %v201, 127
        %v373 = vpop.permute.xlu0 %372
        %374 = vrot.lane.b32.xlu0 %v202, 127
        %v375 = vpop.permute.xlu0 %374
        %376 = vrot.lane.b32.xlu0 %v203, 127
        %v377 = vpop.permute.xlu0 %376
        %378 = vrot.lane.b32.xlu0 %v204, 127
        %v379 = vpop.permute.xlu0 %378
        %380 = vrot.lane.b32.xlu0 %v205, 127
        %v381 = vpop.permute.xlu0 %380
        %v390 = vmin.f32 %v198, %v367
        %v391 = vmin.f32 %v199, %v369
        %v392 = vmin.f32 %v200, %v371
        %v393 = vmin.f32 %v201, %v373
        %v394 = vmin.f32 %v202, %v375
        %v395 = vmin.f32 %v203, %v377
        %v396 = vmin.f32 %v204, %v379
        %v397 = vmin.f32 %v205, %v381
        %v398 = vmax.f32 %v198, %v367
        %v399 = vmax.f32 %v199, %v369
        %v400 = vmax.f32 %v200, %v371
        %v401 = vmax.f32 %v201, %v373
        %v402 = vmax.f32 %v202, %v375
        %v403 = vmax.f32 %v203, %v377
        %v404 = vmax.f32 %v204, %v379
        %v405 = vmax.f32 %v205, %v381
        %406 = vrot.lane.b32.xlu0 %v198, 126
        %v407 = vpop.permute.xlu0 %406
        %408 = vrot.lane.b32.xlu0 %v199, 126
        %v409 = vpop.permute.xlu0 %408
        %410 = vrot.lane.b32.xlu0 %v200, 126
        %v411 = vpop.permute.xlu0 %410
        %412 = vrot.lane.b32.xlu0 %v201, 126
        %v413 = vpop.permute.xlu0 %412
        %414 = vrot.lane.b32.xlu0 %v202, 126
        %v415 = vpop.permute.xlu0 %414
        %416 = vrot.lane.b32.xlu0 %v203, 126
        %v417 = vpop.permute.xlu0 %416
        %418 = vrot.lane.b32.xlu0 %v204, 126
        %v419 = vpop.permute.xlu0 %418
        %420 = vrot.lane.b32.xlu0 %v205, 126
        %v421 = vpop.permute.xlu0 %420
        %v430 = vmin.f32 %v398, %v407
        %v431 = vmin.f32 %v399, %v409
        %v432 = vmin.f32 %v400, %v411
        %v433 = vmin.f32 %v401, %v413
        %v434 = vmin.f32 %v402, %v415
        %v435 = vmin.f32 %v403, %v417
        %v436 = vmin.f32 %v404, %v419
        %v437 = vmin.f32 %v405, %v421
        %v438 = vmax.f32 %v390, %v430
        %v439 = vmax.f32 %v391, %v431
        %v440 = vmax.f32 %v392, %v432
        %v441 = vmax.f32 %v393, %v433
        %v442 = vmax.f32 %v394, %v434
        %v443 = vmax.f32 %v395, %v435
        %v444 = vmax.f32 %v396, %v436
        %v445 = vmax.f32 %v397, %v437
        %v446 = vmin.f32 %v278, %v438
        %v447 = vmin.f32 %v279, %v439
        %v448 = vmin.f32 %v280, %v440
        %v449 = vmin.f32 %v281, %v441
        %v450 = vmin.f32 %v282, %v442
        %v451 = vmin.f32 %v283, %v443
        %v452 = vmin.f32 %v284, %v444
        %v453 = vmin.f32 %v285, %v445
        %v454 = vmax.f32 %v278, %v438
        %v455 = vmax.f32 %v279, %v439
        %v456 = vmax.f32 %v280, %v440
        %v457 = vmax.f32 %v281, %v441
        %v458 = vmax.f32 %v282, %v442
        %v459 = vmax.f32 %v283, %v443
        %v460 = vmax.f32 %v284, %v444
        %v461 = vmax.f32 %v285, %v445
        %v462 = vmin.f32 %v454, %v350
        %v463 = vmin.f32 %v455, %v351
        %v464 = vmin.f32 %v456, %v352
        %v465 = vmin.f32 %v457, %v353
        %v466 = vmin.f32 %v458, %v354
        %v467 = vmin.f32 %v459, %v355
        %v468 = vmin.f32 %v460, %v356
        %v469 = vmin.f32 %v461, %v357
        %v470 = vmax.f32 %v446, %v462
        %v471 = vmax.f32 %v447, %v463
        %v472 = vmax.f32 %v448, %v464
        %v473 = vmax.f32 %v449, %v465
        %v474 = vmax.f32 %v450, %v466
        %v475 = vmax.f32 %v451, %v467
        %v476 = vmax.f32 %v452, %v468
        %v477 = vmax.f32 %v453, %v469
        %vm478 = vcmask 113664
        %479 = vst.msk [vmem:[%s140] sm:$0xff] %vm478, %v470
        %vm480 = vcmask 111616
        %481 = vst.msk [vmem:[%s140 + $0x8] sm:$0x3f] %vm480, %v471
        %482 = vst.msk [vmem:[%s140 + $0x10] sm:$0xff] %vm478, %v472
        %483 = vst.msk [vmem:[%s140 + $0x18] sm:$0x3f] %vm480, %v473
        %484 = vst.msk [vmem:[%s140 + $0x20] sm:$0xff] %vm478, %v474
        %485 = vst.msk [vmem:[%s140 + $0x28] sm:$0x3f] %vm480, %v475
        %486 = vst.msk [vmem:[%s140 + $0x30] sm:$0xff] %vm478, %v476
        %487 = vst.msk [vmem:[%s140 + $0x38] sm:$0x3f] %vm480, %v477
        %s488 = smul.u32 4, %s15
        %p489 = scmp.lt.s32.totalorder %s488, 7
        %s490 = scalar_select %p489, %s488, 7
        %s491 = smul.addr %s490, 2
        %s492 = smul.addr %s491, 8
        %s493 = scalar_lea.vmem %s1, %s492
        // Predicated region
        $region29: #{tpu_custom_call.1} parent=23 // pred_check
          %p494 = pneg %p59
        $region30: #{tpu_custom_call.1} parent=23 // pred_check_branch
          %496 = sbr.rel (%p494) target = $region32
        $region31: #{tpu_custom_call.1} parent=23 // pred_region
          %s497 = smul.u32 4, %s15
        $region32: #{tpu_custom_call.1} parent=23 // pred_fallthru
          _
      $region24: #{tpu_custom_call.1} parent=5 // pred_fallthru
        _
      %p498 = scmp.le.s32.totalorder 2, %s10
      // Predicated region
      $region33: #{tpu_custom_call.1} parent=5 // pred_check
        %p499 = pneg %p498
      $region34: #{tpu_custom_call.1} parent=5 // pred_check_branch
        %501 = sbr.rel (%p499) target = $region36
      $region35: #{tpu_custom_call.1} parent=5 // pred_region
        %s502 = ssub.s32 %s10, 2
        // Predicated region
        $region37: #{tpu_custom_call.1} parent=35 // pred_check
          %p503 = pneg %p65
        $region38: #{tpu_custom_call.1} parent=35 // pred_check_branch
          %505 = sbr.rel (%p503) target = $region40
        $region39: #{tpu_custom_call.1} parent=35 // pred_region
          %s506 = smul.u32 4, %s16
          %p507 = scmp.lt.s32.totalorder %s506, 7
          %s508 = scalar_select %p507, %s506, 7
          %s509 = smul.addr %s508, 2
          %s510 = smul.addr %s509, 8
          %s511 = scalar_lea.vmem %s1, %s510
        $region40: #{tpu_custom_call.1} parent=35 // pred_fallthru
          _
      $region36: #{tpu_custom_call.1} parent=5 // pred_fallthru
        _
    $region6: #{tpu_custom_call.1} parent=1 // loop_footer
      %s14 = sadd.s32 1, %s10
    $region7: #{tpu_custom_call.1} parent=1 // loop_footer_branch
      %9 = sbr.rel target = $region3
    $region8: #{tpu_custom_call.1} parent=1 // loop_exit
      _
    %512 = vsyncpa [#allocation3], 1
    %s513 = scalar_lea.sflag [#allocation3], 1
    %514 = vsyncpa %s513, 1

</llo_original>
